<compile_context>
chip_gen: v5e
topology: v5e:2x2
jax: 0.10.0
libtpu: 0.0.40
codegen_flags: <defaults>
</compile_context>

<pallas_src>
import functools

import jax
import jax.numpy as jnp
from jax.experimental import pallas as pl
from jax.experimental.pallas import tpu as pltpu

# (a, c) x (b, c) -> (a, b): rhs-transposed matmul dimension numbers.
_NT_DIM_NUMBERS = (((1,), (1,)), ((), ()))


def _backbone_update_kernel(s_ref, w_ref, b_ref, o_ref):
    # s_ref: (TILE_M, C)   single-representation rows (native dtype)
    # w_ref: (8, C)        linear weight, rows 0..5 real, rows 6..7 zero
    # b_ref: (8, 1)        linear bias (f32), rows 0..5 real
    # o_ref: (16, TILE_M)  transposed, row-major-flattened 4x4 transforms
    outs_t = jax.lax.dot_general(
        w_ref[...], s_ref[...], _NT_DIM_NUMBERS,
        preferred_element_type=jnp.float32,
    ) + b_ref[...]                                    # (8, TILE_M), lane-dense

    b = outs_t[0:1, :]
    c = outs_t[1:2, :]
    d = outs_t[2:3, :]
    tx = outs_t[3:4, :]
    ty = outs_t[4:5, :]
    tz = outs_t[5:6, :]

    # Quaternion (1, b, c, d), normalized; a == 1 before normalization.
    inv = jax.lax.rsqrt(1.0 + b * b + c * c + d * d)
    a = inv
    b = b * inv
    c = c * inv
    d = d * inv

    aa, bb, cc, dd = a * a, b * b, c * c, d * d
    ab, ac, ad = a * b, a * c, a * d
    bc, bd, cd = b * c, b * d, c * d

    r00 = aa + bb - cc - dd
    r01 = 2.0 * (bc - ad)
    r02 = 2.0 * (bd + ac)
    r10 = 2.0 * (bc + ad)
    r11 = aa - bb + cc - dd
    r12 = 2.0 * (cd - ab)
    r20 = 2.0 * (bd - ac)
    r21 = 2.0 * (cd + ab)
    r22 = aa - bb - cc + dd

    zeros = jnp.zeros_like(a)
    ones = jnp.ones_like(a)

    # Rows 0..15 = row-major flattened [[R, t], [0 0 0 1]].
    out = jnp.concatenate(
        [r00, r01, r02, tx,
         r10, r11, r12, ty,
         r20, r21, r22, tz,
         zeros, zeros, zeros, ones],
        axis=0,
    )                                                  # (16, TILE_M)
    o_ref[...] = out.astype(o_ref.dtype)


def prepare_backbone_params(weight, bias, dtype=jnp.float32):
    """Pad the torch-layout Linear params once (hoisted out of the hot path).

    weight: (6, c_s) (torch Linear layout); bias: (6,).
    Returns w_pad (8, c_s) in `dtype`, b_pad (8, 1) f32.
    """
    c_s = weight.shape[1]
    w_pad = jnp.zeros((8, c_s), dtype=dtype).at[:6, :].set(weight.astype(dtype))
    b_pad = jnp.zeros((8, 1), dtype=jnp.float32).at[:6, 0].set(
        bias.astype(jnp.float32))
    return w_pad, b_pad


def _round_up(x, n):
    return ((x + n - 1) // n) * n


def _round_down(x, n):
    return (x // n) * n


def _select_tile_m(m, c_s, itemsize, requested):
    """Pick a legal, VMEM-safe, 2-TC-friendly row tile. Returns (tile, grid)."""
    # Lane constraint on the (16, tile) output block: multiple of 128.
    tile = max(128, _round_down(int(requested), 128))
    # Keep >= 2 grid steps when m > 128 so both v7x TensorCores get work.
    tile = min(tile, max(128, _round_up(pl.cdiv(m, 2), 128)))
    # VMEM cap: double-buffered input block + output block under ~24 MiB
    # (inside the 32 MiB scoped limit; v7x has only 64 MiB physical VMEM).
    per_row = 2 * c_s * itemsize + 2 * 16 * itemsize
    tile = min(tile, max(128, _round_down((24 * 1024 * 1024) // per_row, 128)))
    if tile >= m:
        # Single exact full block: no boundary masking at all.
        return m, 1
    return tile, pl.cdiv(m, tile)


def _backbone_update_slab_impl(s, w_pad, b_pad, tile_m):
    *lead, c_s = s.shape
    m = 1
    for dim in lead:
        m *= dim
    s2d = s.reshape(m, c_s)

    tile, grid_m = _select_tile_m(m, c_s, s.dtype.itemsize, tile_m)

    return pl.pallas_call(
        _backbone_update_kernel,
        out_shape=jax.ShapeDtypeStruct((16, m), s.dtype),
        grid=(grid_m,),
        in_specs=[
            pl.BlockSpec((tile, c_s), lambda i: (i, 0)),   # streamed rows
            pl.BlockSpec((8, c_s), lambda i: (0, 0)),      # resident weight
            pl.BlockSpec((8, 1), lambda i: (0, 0)),        # resident bias
        ],
        out_specs=pl.BlockSpec((16, tile), lambda i: (0, i)),
        compiler_params=pltpu.CompilerParams(
            dimension_semantics=("parallel",),
            vmem_limit_bytes=32 * 1024 * 1024,
        ),
    )(s2d, w_pad, b_pad)


@functools.partial(jax.jit, static_argnames=("tile_m",))
def backbone_update_slab(s, w_pad, b_pad, *, tile_m=4096):
    """Lane-dense (16, M) slab (M = prod of leading dims of s).

    Row layout per residue column: [r00 r01 r02 tx r10 r11 r12 ty
    r20 r21 r22 tz 0 0 0 1].  Use this entry point when the consumer can take
    the transposed layout and skip the HBM transpose entirely.
    """
    return _backbone_update_slab_impl(s, w_pad, b_pad, tile_m)


@functools.partial(jax.jit, static_argnames=("tile_m",))
def backbone_update(s, w_pad, b_pad, *, tile_m=4096):
    """s: (*, N_res, c_s); w_pad: (8, c_s); b_pad: (8, 1).

    Returns (*, N_res, 4, 4) backbone transforms (module semantics).
    """
    *lead, _ = s.shape
    slab = _backbone_update_slab_impl(s, w_pad, b_pad, tile_m)
    # Layout plumbing only (required by the (*, 4, 4) return contract); use
    # backbone_update_slab() to avoid this extra HBM round-trip.
    return jnp.transpose(slab).reshape(*lead, 4, 4)


def _reference(s, weight, bias):
    """Pure-JAX reference of the PyTorch forward."""
    outs = jnp.einsum("...c,oc->...o", s, weight) + bias
    quat = jnp.concatenate(
        [jnp.ones(s.shape[:-1] + (1,), dtype=s.dtype), outs[..., :3]], axis=-1)
    quat = quat / jnp.linalg.norm(quat, axis=-1, keepdims=True)
    a, b, c, d = quat[..., 0], quat[..., 1], quat[..., 2], quat[..., 3]
    R = jnp.stack(
        [
            jnp.stack([a * a + b * b - c * c - d * d, 2 * (b * c - a * d), 2 * (b * d + a * c)], -1),
            jnp.stack([2 * (b * c + a * d), a * a - b * b + c * c - d * d, 2 * (c * d - a * b)], -1),
            jnp.stack([2 * (b * d - a * c), 2 * (c * d + a * b), a * a - b * b - c * c + d * d], -1),
        ],
        axis=-2,
    )
    t = outs[..., 3:]
    top = jnp.concatenate([R, t[..., None]], axis=-1)               # (*, 3, 4)
    bottom = jnp.zeros(s.shape[:-1] + (1, 4), dtype=s.dtype).at[..., 0, 3].set(1.0)
    return jnp.concatenate([top, bottom], axis=-2)                  # (*, 4, 4)


if __name__ == "__main__":
    key = jax.random.PRNGKey(0)
    k_s, k_w, k_b, k_s2 = jax.random.split(key, 4)

    # Small primary case.
    batch, n_res, c_s = 2, 8, 32
    s = jax.random.normal(k_s, (batch, n_res, c_s), dtype=jnp.float32)
    # Deterministic "Linear(c_s, 6)" parameters (torch layout: weight (6, c_s)).
    bound = 1.0 / jnp.sqrt(c_s)
    weight = jax.random.uniform(k_w, (6, c_s), minval=-bound, maxval=bound,
                                dtype=jnp.float32)
    bias = jax.random.uniform(k_b, (6,), minval=-bound, maxval=bound,
                              dtype=jnp.float32)

    w_pad, b_pad = prepare_backbone_params(weight, bias, dtype=s.dtype)
    out = backbone_update(s, w_pad, b_pad)
    jax.block_until_ready(out)

    ref = _reference(s, weight, bias)
    assert out.shape == (batch, n_res, 4, 4)
    assert jnp.allclose(out, ref, atol=2e-5, rtol=2e-5)

    # Second case with M not a multiple of the tile: exercises the un-padded
    # partial-tail-block path (grid = cdiv(M, tile), masked boundary blocks).
    s2 = jax.random.normal(k_s2, (1, 300, c_s), dtype=jnp.float32)
    out2 = backbone_update(s2, w_pad, b_pad, tile_m=256)
    jax.block_until_ready(out2)
    ref2 = _reference(s2, weight, bias)
    assert out2.shape == (1, 300, 4, 4)
    assert jnp.allclose(out2, ref2, atol=2e-5, rtol=2e-5)

    print("KERNEL_OK")
</pallas_src>

<mosaic_0001>
module attributes {stable_mosaic.version = 11 : i64} {
  func.func @_backbone_update_kernel(%arg0: i32, %arg1: memref<16x32xf32, #tpu.memory_space<vmem>>, %arg2: memref<8x32xf32, #tpu.memory_space<vmem>>, %arg3: memref<8x1xf32, #tpu.memory_space<vmem>>, %arg4: memref<16x16xf32, #tpu.memory_space<vmem>>) attributes {dimension_semantics = [#tpu.dimension_semantics<parallel>], iteration_bounds = array<i64: 1>, scalar_prefetch = 0 : i64, scratch_operands = 0 : i64, tpu.core_type = #tpu.core_type<tc>, window_params = [{transform_indices = @transform_0, window_bounds = array<i64: 16, 32>}, {pipeline_mode = #tpu.pipeline_mode<synchronous>, transform_indices = @transform_1, window_bounds = array<i64: 8, 32>}, {pipeline_mode = #tpu.pipeline_mode<synchronous>, transform_indices = @transform_2, window_bounds = array<i64: 8, 1>}, {transform_indices = @transform_3, window_bounds = array<i64: 16, 16>}]} {
    %c0 = arith.constant 0 : index
    %c0_0 = arith.constant 0 : index
    %0 = vector.load %arg2[%c0, %c0_0] : memref<8x32xf32, #tpu.memory_space<vmem>>, vector<8x32xf32>
    %c0_1 = arith.constant 0 : index
    %c0_2 = arith.constant 0 : index
    %1 = vector.load %arg1[%c0_1, %c0_2] : memref<16x32xf32, #tpu.memory_space<vmem>>, vector<16x32xf32>
    %cst = arith.constant dense<0.000000e+00> : vector<8x16xf32>
    %2 = tpu.matmul %0, %1, %cst {dimension_numbers = #tpu.dot_dimension_numbers<[1], [1], [0], [0], [0, 0, 1, 0], [], []>} : vector<8x32xf32>, vector<16x32xf32>, vector<8x16xf32> -> vector<8x16xf32>
    %c0_3 = arith.constant 0 : index
    %c0_4 = arith.constant 0 : index
    %3 = vector.load %arg3[%c0_3, %c0_4] : memref<8x1xf32, #tpu.memory_space<vmem>>, vector<8x1xf32>
    %4 = vector.broadcast %3 : vector<8x1xf32> to vector<8x16xf32>
    %5 = arith.addf %2, %4 : vector<8x16xf32>
    %6 = vector.extract_strided_slice %5 {offsets = [0, 0], sizes = [1, 16], strides = [1, 1]} : vector<8x16xf32> to vector<1x16xf32>
    %7 = vector.extract_strided_slice %5 {offsets = [1, 0], sizes = [1, 16], strides = [1, 1]} : vector<8x16xf32> to vector<1x16xf32>
    %8 = vector.extract_strided_slice %5 {offsets = [2, 0], sizes = [1, 16], strides = [1, 1]} : vector<8x16xf32> to vector<1x16xf32>
    %9 = vector.extract_strided_slice %5 {offsets = [3, 0], sizes = [1, 16], strides = [1, 1]} : vector<8x16xf32> to vector<1x16xf32>
    %10 = vector.extract_strided_slice %5 {offsets = [4, 0], sizes = [1, 16], strides = [1, 1]} : vector<8x16xf32> to vector<1x16xf32>
    %11 = vector.extract_strided_slice %5 {offsets = [5, 0], sizes = [1, 16], strides = [1, 1]} : vector<8x16xf32> to vector<1x16xf32>
    %12 = arith.mulf %6, %6 : vector<1x16xf32>
    %cst_5 = arith.constant 1.000000e+00 : f32
    %13 = vector.broadcast %cst_5 : f32 to vector<1x16xf32>
    %14 = arith.addf %13, %12 : vector<1x16xf32>
    %15 = arith.mulf %7, %7 : vector<1x16xf32>
    %16 = arith.addf %14, %15 : vector<1x16xf32>
    %17 = arith.mulf %8, %8 : vector<1x16xf32>
    %18 = arith.addf %16, %17 : vector<1x16xf32>
    %19 = math.rsqrt %18 : vector<1x16xf32>
    %20 = arith.mulf %6, %19 : vector<1x16xf32>
    %21 = arith.mulf %7, %19 : vector<1x16xf32>
    %22 = arith.mulf %8, %19 : vector<1x16xf32>
    %23 = arith.mulf %19, %19 : vector<1x16xf32>
    %24 = arith.mulf %20, %20 : vector<1x16xf32>
    %25 = arith.mulf %21, %21 : vector<1x16xf32>
    %26 = arith.mulf %22, %22 : vector<1x16xf32>
    %27 = arith.mulf %19, %20 : vector<1x16xf32>
    %28 = arith.mulf %19, %21 : vector<1x16xf32>
    %29 = arith.mulf %19, %22 : vector<1x16xf32>
    %30 = arith.mulf %20, %21 : vector<1x16xf32>
    %31 = arith.mulf %20, %22 : vector<1x16xf32>
    %32 = arith.mulf %21, %22 : vector<1x16xf32>
    %33 = arith.addf %23, %24 : vector<1x16xf32>
    %34 = arith.subf %33, %25 : vector<1x16xf32>
    %35 = arith.subf %34, %26 : vector<1x16xf32>
    %36 = arith.subf %30, %29 : vector<1x16xf32>
    %cst_6 = arith.constant 2.000000e+00 : f32
    %37 = vector.broadcast %cst_6 : f32 to vector<1x16xf32>
    %38 = arith.mulf %37, %36 : vector<1x16xf32>
    %39 = arith.addf %31, %28 : vector<1x16xf32>
    %cst_7 = arith.constant 2.000000e+00 : f32
    %40 = vector.broadcast %cst_7 : f32 to vector<1x16xf32>
    %41 = arith.mulf %40, %39 : vector<1x16xf32>
    %42 = arith.addf %30, %29 : vector<1x16xf32>
    %cst_8 = arith.constant 2.000000e+00 : f32
    %43 = vector.broadcast %cst_8 : f32 to vector<1x16xf32>
    %44 = arith.mulf %43, %42 : vector<1x16xf32>
    %45 = arith.subf %23, %24 : vector<1x16xf32>
    %46 = arith.addf %45, %25 : vector<1x16xf32>
    %47 = arith.subf %46, %26 : vector<1x16xf32>
    %48 = arith.subf %32, %27 : vector<1x16xf32>
    %cst_9 = arith.constant 2.000000e+00 : f32
    %49 = vector.broadcast %cst_9 : f32 to vector<1x16xf32>
    %50 = arith.mulf %49, %48 : vector<1x16xf32>
    %51 = arith.subf %31, %28 : vector<1x16xf32>
    %cst_10 = arith.constant 2.000000e+00 : f32
    %52 = vector.broadcast %cst_10 : f32 to vector<1x16xf32>
    %53 = arith.mulf %52, %51 : vector<1x16xf32>
    %54 = arith.addf %32, %27 : vector<1x16xf32>
    %cst_11 = arith.constant 2.000000e+00 : f32
    %55 = vector.broadcast %cst_11 : f32 to vector<1x16xf32>
    %56 = arith.mulf %55, %54 : vector<1x16xf32>
    %57 = arith.subf %23, %24 : vector<1x16xf32>
    %58 = arith.subf %57, %25 : vector<1x16xf32>
    %59 = arith.addf %58, %26 : vector<1x16xf32>
    %cst_12 = arith.constant 0.000000e+00 : f32
    %60 = vector.broadcast %cst_12 : f32 to vector<1x16xf32>
    %cst_13 = arith.constant 1.000000e+00 : f32
    %61 = vector.broadcast %cst_13 : f32 to vector<1x16xf32>
    %62 = tpu.concatenate %35, %38, %41, %9, %44, %47, %50, %10, %53, %56, %59, %11, %60, %60, %60, %61 in 0 : vector<1x16xf32>, vector<1x16xf32>, vector<1x16xf32>, vector<1x16xf32>, vector<1x16xf32>, vector<1x16xf32>, vector<1x16xf32>, vector<1x16xf32>, vector<1x16xf32>, vector<1x16xf32>, vector<1x16xf32>, vector<1x16xf32>, vector<1x16xf32>, vector<1x16xf32>, vector<1x16xf32>, vector<1x16xf32> -> vector<16x16xf32>
    %c0_14 = arith.constant 0 : index
    %c0_15 = arith.constant 0 : index
    %63 = vector.load %arg4[%c0_14, %c0_15] : memref<16x16xf32, #tpu.memory_space<vmem>>, vector<16x16xf32>
    tpu.vector_store %arg4[%c0_14, %c0_15], %62 {strides = array<i32>} : memref<16x16xf32, #tpu.memory_space<vmem>>, vector<16x16xf32>,
    return
  }
  func.func @transform_0(%arg0: i32) -> (i32, i32) {
    %c0_i32 = arith.constant 0 : i32
    %c0_i32_0 = arith.constant 0 : i32
    return %arg0, %c0_i32 : i32, i32
  }
  func.func @transform_1(%arg0: i32) -> (i32, i32) {
    %c0_i32 = arith.constant 0 : i32
    %c0_i32_0 = arith.constant 0 : i32
    %c0_i32_1 = arith.constant 0 : i32
    return %c0_i32, %c0_i32_0 : i32, i32
  }
  func.func @transform_2(%arg0: i32) -> (i32, i32) {
    %c0_i32 = arith.constant 0 : i32
    %c0_i32_0 = arith.constant 0 : i32
    %c0_i32_1 = arith.constant 0 : i32
    return %c0_i32, %c0_i32_0 : i32, i32
  }
  func.func @transform_3(%arg0: i32) -> (i32, i32) {
    %c0_i32 = arith.constant 0 : i32
    %c0_i32_0 = arith.constant 0 : i32
    return %c0_i32, %arg0 : i32, i32
  }
}

</mosaic_0001>

<llo_original>
// kernel: backbone_update.1
$region0: #{backbone_update.1}
  #allocation0 [shape = 'u32[]', space=smem, size = 0x4, offset = 0x4, fixed_abs, tag = 'smem constant byte address 0x4 - core index']
  #allocation1 [shape = 'u32[72,128]{1,0:T(1,128)}', space=vmem, size = 0x9000, scoped, tag = 'internal scratch']
  %s0 = inlined_call_operand.hbm [shape: f32[16,32], index: 0, kind: input, shape index: {}]
  %s1 = inlined_call_operand.vmem [shape: f32[8,32], index: 1, kind: input, shape index: {}]
  %s2 = inlined_call_operand.vmem [shape: f32[8,1], index: 2, kind: input, shape index: {}]
  %s3 = inlined_call_operand.vmem [shape: f32[16,16], index: 3, kind: output, shape index: {}]
  %s4 = sld [smem:[#allocation0]]
  $region26: #{backbone_update.1} parent=0
    _
  %s6 = ssub.s32 1, %s4
  %s7 = scalar_select 0, %s6, %s4
  $region1: #{backbone_update.1} parent=0
    #allocation2 [shape = 'u8[8192]{0}', space=vmem, size = 0x2000, scoped, tag = 'input window, operand 0, single buffered']
    #allocation3 [shape = 's32[1]{0}', space=sflag, size = 0x4, scoped, tag = 'scoped memory for backbone_update.1']
    %8 = vsyncpa [#allocation3], 0
    // Predicated region
    $region2: #{backbone_update.1} parent=1 // pred_check
      _
    $region3: #{backbone_update.1} parent=1 // pred_check_branch
      %10 = sbr.rel (0) target = $region5
    $region4: #{backbone_update.1} parent=1 // pred_region
      %12 = vsyncadd [#allocation3], 0
      %s13 = sshll.u32 %s0, 4
      %s14 = int_to_ptr.hbm [resolvable:$true] %s13
      %s15 = sshll.u32 [#allocation2], 4
      %s16 = int_to_ptr.vmem [resolvable:$true] %s15
      %21 = dma.hbm_to_vmem [thread:$0]  %s14, 256, %s16, [#allocation3], 128, 128, 8
    $region5: #{backbone_update.1} parent=1 // pred_fallthru
      _
    // Predicated region
    $region6: #{backbone_update.1} parent=1 // pred_check
      _
    $region7: #{backbone_update.1} parent=1 // pred_check_branch
      %23 = sbr.rel (0) target = $region9
    $region8: #{backbone_update.1} parent=1 // pred_region
      _
    $region9: #{backbone_update.1} parent=1 // pred_fallthru
      _
    // Predicated region
    $region10: #{backbone_update.1} parent=1 // pred_check
      _
    $region11: #{backbone_update.1} parent=1 // pred_check_branch
      %25 = sbr.rel (0) target = $region13
    $region12: #{backbone_update.1} parent=1 // pred_region
      _
    $region13: #{backbone_update.1} parent=1 // pred_fallthru
      _
    // Predicated region
    $region14: #{backbone_update.1} parent=1 // pred_check
      _
    $region15: #{backbone_update.1} parent=1 // pred_check_branch
      %27 = sbr.rel (0) target = $region17
    $region16: #{backbone_update.1} parent=1 // pred_region
      %29 = dma.done [#allocation3], 256
    $region17: #{backbone_update.1} parent=1 // pred_fallthru
      _
    %v30 = vld [vmem:[%s1] sm:$0xff]
    %v31 = vld [vmem:[#allocation2] sm:$0xff]
    %v32 = vld [vmem:[#allocation2 + $0x8] sm:$0xff]
    %v33 = vld [vmem:[%s2] sm:$0xff]
    %35 = vset.pattern.permute.xlu0 0
    %36 = vperm.xlu0 %35, %v33
    %v37 = vpop.permute.xlu0 %36
    %vm39 = vcmask 261120
    %v41 = vsel %vm39, %v30, 0
    %v44 = vsel %vm39, %v31, 0
    %v47 = vsel %vm39, %v32, 0
    %49 = vmatpush.xpose.msra.mxu0 0.0
    %50 = vmatpush.xpose.msra.mxu0 0.0
    %51 = vmatpush.xpose.msra.mxu0 0.0
    %52 = vmatpush.xpose.msra.mxu0 0.0
    %53 = vmatpush.xpose.msra.mxu0 0.0
    %54 = vmatpush.xpose.msra.mxu0 0.0
    %55 = vmatpush.xpose.msra.mxu0 0.0
    %56 = vmatpush.xpose.msra.mxu0 0.0
    %57 = vmatpush.xpose.msra.mxu0 0.0
    %58 = vmatpush.xpose.msra.mxu0 0.0
    %59 = vmatpush.xpose.msra.mxu0 0.0
    %60 = vmatpush.xpose.msra.mxu0 0.0
    %61 = vmatpush.xpose.msra.mxu0 0.0
    %62 = vmatpush.xpose.msra.mxu0 0.0
    %63 = vmatpush.xpose.msra.mxu0 %v47
    %64 = vmatpush.xpose.msra.mxu0 %v44
    %65 = vmatmul.f32.gmra.mxu0 %v41
    %v66 = vpop.f32.mrf.mxu0
    %v67 = vadd.f32 %v37, %v66
    %68 = vdwg.mxu0
    %v69 = vmul.f32 %v67, %v67
    %v70 = vadd.f32 %v69, 1.0
    %v72 = vrot.slane %v69, 1
    %v74 = vadd.f32 %v70, %v72
    %v75 = vrot.slane %v69, 2
    %v77 = vadd.f32 %v74, %v75
    %v78 = vrsqrt.pop %v77
    %v79 = vmul.f32 %v78, %v77
    %v80 = vmul.f32 %v79, %v78
    %v81 = vmul.f32 0.5, %v80
    %v82 = vsub.f32 1.5, %v81
    %v83 = vmul.f32 %v78, %v82
    %vm84 = vweird.f32 %v77
    %vm85 = vweird.f32 %v78
    %vm86 = vmor %vm84, %vm85
    %v87 = vsel %vm86, %v78, %v83
    %v88 = vmul.f32 %v67, %v87
    %v90 = vrot.slane %v87, 7
    %v92 = vmul.f32 %v67, %v90
    %v93 = vrot.slane %v87, 6
    %v95 = vmul.f32 %v67, %v93
    %v96 = vmul.f32 %v87, %v87
    %v97 = vmul.f32 %v88, %v88
    %v98 = vmul.f32 %v92, %v92
    %v99 = vmul.f32 %v95, %v95
    %v100 = vmul.f32 %v87, %v88
    %v102 = vrot.slane %v92, 1
    %v104 = vmul.f32 %v87, %v102
    %v106 = vrot.slane %v95, 2
    %v108 = vmul.f32 %v87, %v106
    %v109 = vmul.f32 %v88, %v102
    %v110 = vmul.f32 %v88, %v106
    %v111 = vrot.slane %v95, 1
    %v113 = vmul.f32 %v92, %v111
    %v114 = vadd.f32 %v96, %v97
    %v116 = vrot.slane %v98, 1
    %v118 = vsub.f32 %v114, %v116
    %v120 = vrot.slane %v99, 2
    %v122 = vsub.f32 %v118, %v120
    %v123 = vsub.f32 %v109, %v108
    %v124 = vmul.f32 %v123, 2.0
    %v125 = vadd.f32 %v110, %v104
    %v126 = vmul.f32 %v125, 2.0
    %v127 = vadd.f32 %v109, %v108
    %v128 = vmul.f32 %v127, 2.0
    %v129 = vsub.f32 %v96, %v97
    %v130 = vadd.f32 %v129, %v116
    %v131 = vsub.f32 %v130, %v120
    %v133 = vrot.slane %v100, 7
    %v135 = vsub.f32 %v113, %v133
    %v136 = vmul.f32 %v135, 2.0
    %v137 = vsub.f32 %v110, %v104
    %v138 = vmul.f32 %v137, 2.0
    %v139 = vadd.f32 %v113, %v133
    %v140 = vmul.f32 %v139, 2.0
    %v141 = vsub.f32 %v129, %v116
    %v142 = vadd.f32 %v141, %v120
    %v144 = vrot.slane %v124, 7
    %v147 = vrot.slane %v126, 6
    %v150 = vrot.slane %v128, 4
    %v153 = vrot.slane %v131, 3
    %v156 = vrot.slane %v136, 3
    %v159 = vrot.slane %v67, 5
    %v162 = vrot.slane %v142, 6
    %v164 = vrot.slane %v67, 2
    %vm166 = vcmask 1040384
    %v167 = vsel %vm166, %v122, %v144
    %vm168 = vcmask 1041408
    %v169 = vsel %vm168, %v167, %v147
    %vm170 = vcmask 1042432
    %v171 = vsel %vm170, %v169, %v67
    %vm172 = vcmask 1043456
    %v173 = vsel %vm172, %v171, %v150
    %vm174 = vcmask 1044480
    %v175 = vsel %vm174, %v173, %v153
    %vm176 = vcmask 1045504
    %v177 = vsel %vm176, %v175, %v156
    %vm178 = vcmask 1046528
    %v179 = vsel %vm178, %v177, %v159
    %v180 = vsel %vm166, %v138, %v140
    %v181 = vsel %vm168, %v180, %v162
    %v182 = vsel %vm170, %v181, %v164
    %v183 = vsel %vm172, %v182, 0.0
    %v184 = vsel %vm174, %v183, 0.0
    %v185 = vsel %vm176, %v184, 0.0
    %v186 = vsel %vm178, %v185, 1.0
    %vm187 = vcmask 130048
    %188 = vst.msk [vmem:[%s3] sm:$0xff] %vm187, %v179
    %189 = vst.msk [vmem:[%s3 + $0x8] sm:$0xff] %vm187, %v186
    // Predicated region
    $region18: #{backbone_update.1} parent=1 // pred_check
      _
    $region19: #{backbone_update.1} parent=1 // pred_check_branch
      %191 = sbr.rel (0) target = $region21
    $region20: #{backbone_update.1} parent=1 // pred_region
      _
    $region21: #{backbone_update.1} parent=1 // pred_fallthru
      _
    // Predicated region
    $region22: #{backbone_update.1} parent=1 // pred_check
      _
    $region23: #{backbone_update.1} parent=1 // pred_check_branch
      %193 = sbr.rel (0) target = $region25
    $region24: #{backbone_update.1} parent=1 // pred_region
      _
    $region25: #{backbone_update.1} parent=1 // pred_fallthru
      _
    %194 = vsyncpa [#allocation3], 1

</llo_original>
